<compile_context>
chip_gen: v6e
topology: v6e:2x2x1
jax: 0.10.0
libtpu: 0.0.40
codegen_flags: <defaults>
</compile_context>

<pallas_src>
import jax
import jax.numpy as jnp
from jax import lax
from jax.experimental import pallas as pl
from jax.experimental.pallas import tpu as pltpu

LANES = 128
ACC_ROWS = 8        # sublanes of the resident f32 accumulator block
CHUNK_ROWS = 256    # rows per in-kernel strip-mined chunk (multiple of 32)


def _round_up(a, b):
    return ((a + b - 1) // b) * b


def _as_rows(x, rows):
    """View x as a lane-dense (rows, 128) slab (a free reshape when aligned)."""
    flat = x.reshape(-1)
    pad = rows * LANES - flat.shape[0]
    if pad > 0:
        # TODO(synk): only hit when n_elem % 128 != 0; one unavoidable copy to
        # build a rectangular slab.  Padded zeros contribute |0-0|(*0)=0.
        flat = jnp.pad(flat, (0, pad))
    return flat.reshape(rows, LANES)


def _make_kernel(*, has_mask, tile_r, chunk, rows, n_tiles):
    """Build the L1 reduction kernel for a fixed static tiling."""
    bounds = [(lo, min(lo + chunk, tile_r)) for lo in range(0, tile_r, chunk)]
    last_rows = rows - (n_tiles - 1) * tile_r   # valid rows in the last tile
    needs_tail = last_rows < tile_r             # last block extends past array

    def _chunk_loss(in_refs, lo, hi):
        h = hi - lo
        x = in_refs[0][pl.ds(lo, h), :].astype(jnp.float32)
        t = in_refs[1][pl.ds(lo, h), :].astype(jnp.float32)
        loss = jnp.abs(x - t)
        if has_mask:
            loss = loss * in_refs[2][pl.ds(lo, h), :].astype(jnp.float32)
        return loss

    def _accum(acc_ref, loss):
        # (h,128) -> sublane-group partial sums -> add into the (8,128) acc.
        h = loss.shape[0]
        full = (h // ACC_ROWS) * ACC_ROWS
        if full:
            acc_ref[...] += jnp.sum(
                loss[:full].reshape(full // ACC_ROWS, ACC_ROWS, LANES), axis=0)
        rem = h - full
        if rem:
            acc_ref[:rem, :] += loss[full:, :]

    def _full_tile(in_refs, acc_ref):
        for lo, hi in bounds:
            _accum(acc_ref, _chunk_loss(in_refs, lo, hi))

    def _tail_tile(in_refs, acc_ref):
        # Last (partial) tile: rows >= last_rows hold unspecified data.
        # Statically skip fully-invalid chunks, iota-mask the boundary chunk.
        for lo, hi in bounds:
            if lo >= last_rows:
                break
            loss = _chunk_loss(in_refs, lo, hi)
            if hi > last_rows:
                row = lax.broadcasted_iota(jnp.int32, (hi - lo, LANES), 0) + lo
                loss = jnp.where(row < last_rows, loss, 0.0)
            _accum(acc_ref, loss)

    def kernel(*args):
        in_refs, acc_ref = args[:-1], args[-1]
        i = pl.program_id(0)

        @pl.when(i == 0)
        def _init():
            acc_ref[...] = jnp.zeros_like(acc_ref)

        if not needs_tail:
            _full_tile(in_refs, acc_ref)
        elif n_tiles == 1:
            _tail_tile(in_refs, acc_ref)
        else:
            @pl.when(i < n_tiles - 1)
            def _body():
                _full_tile(in_refs, acc_ref)

            @pl.when(i == n_tiles - 1)
            def _tail():
                _tail_tile(in_refs, acc_ref)

    return kernel


def masked_l1_loss(inp, target, mask=None, *, tile_rows=8192):
    assert inp.shape == target.shape
    if mask is not None:
        assert mask.shape == inp.shape
        if mask.dtype == jnp.bool_:
            # Keep the mask 1 byte on the wire; upcast to f32 after VMEM load.
            mask = mask.astype(jnp.int8)

    n_elem = 1
    for s in inp.shape:
        n_elem *= int(s)
    rows = pl.cdiv(n_elem, LANES)

    operands = [inp, target] + ([mask] if mask is not None else [])
    slabs = [_as_rows(o, rows) for o in operands]

    # Tiling: one exact-size tile when the slab fits in a single (big) block,
    # otherwise fixed CHUNK_ROWS-aligned tiles with an in-kernel ragged tail.
    tile_cap = _round_up(max(int(tile_rows), CHUNK_ROWS), CHUNK_ROWS)
    tile_r = rows if rows <= tile_cap else tile_cap
    n_tiles = pl.cdiv(rows, tile_r)
    chunk = min(CHUNK_ROWS, tile_r)

    kernel = _make_kernel(has_mask=mask is not None, tile_r=tile_r,
                          chunk=chunk, rows=rows, n_tiles=n_tiles)

    in_spec = pl.BlockSpec((tile_r, LANES), lambda i: (i, 0))

    # Double-buffered streamed inputs + chunk temporaries / accumulator slack.
    stream_bytes = sum(2 * tile_r * LANES * jnp.dtype(s.dtype).itemsize
                       for s in slabs)
    vmem_limit = int(min(max(stream_bytes + (8 << 20), 16 << 20), 56 << 20))

    partial = pl.pallas_call(
        kernel,
        out_shape=jax.ShapeDtypeStruct((ACC_ROWS, LANES), jnp.float32),
        grid_spec=pltpu.PrefetchScalarGridSpec(
            num_scalar_prefetch=0,
            grid=(n_tiles,),
            in_specs=[in_spec] * len(slabs),
            out_specs=pl.BlockSpec((ACC_ROWS, LANES), lambda i: (0, 0)),
        ),
        compiler_params=pltpu.CompilerParams(
            dimension_semantics=("arbitrary",),
            vmem_limit_bytes=vmem_limit),
    )(*slabs)

    # One tiny XLA op: cross-lane reduce of (8,128) + mean scale.
    return jnp.sum(partial) / jnp.float32(n_elem)


if __name__ == "__main__":
    key = jax.random.PRNGKey(0)
    k1, k2, k3 = jax.random.split(key, 3)

    B, C, H, W = 2, 4, 16, 16  # NCHW, same as PyTorch
    x = jax.random.normal(k1, (B, C, H, W), dtype=jnp.float32)
    t = jax.random.normal(k2, (B, C, H, W), dtype=jnp.float32)
    mask = (jax.random.uniform(k3, (B, C, H, W)) > 0.5).astype(jnp.float32)

    # float mask
    out = jax.block_until_ready(masked_l1_loss(x, t, mask))
    ref = jnp.mean(jnp.abs(x - t) * mask)
    assert jnp.allclose(out, ref, rtol=1e-5, atol=1e-6), (out, ref)

    # bool mask (streams as int8, upcast in VMEM)
    mask_b = jax.random.uniform(k3, (B, C, H, W)) > 0.5
    out_b = jax.block_until_ready(masked_l1_loss(x, t, mask_b))
    ref_b = jnp.mean(jnp.abs(x - t) * mask_b.astype(jnp.float32))
    assert jnp.allclose(out_b, ref_b, rtol=1e-5, atol=1e-6), (out_b, ref_b)

    # no mask (specialised 2-input kernel)
    out_p = jax.block_until_ready(masked_l1_loss(x, t, None))
    ref_p = jnp.mean(jnp.abs(x - t))
    assert jnp.allclose(out_p, ref_p, rtol=1e-5, atol=1e-6), (out_p, ref_p)

    # Row count not a multiple of 8: exercises the sub-sublane remainder path.
    x2 = jax.random.normal(k1, (2, 4, 12, 12), dtype=jnp.float32)  # 1152 = 9*128
    t2 = jax.random.normal(k2, (2, 4, 12, 12), dtype=jnp.float32)
    m2 = (jax.random.uniform(k3, (2, 4, 12, 12)) > 0.5).astype(jnp.float32)
    out2 = jax.block_until_ready(masked_l1_loss(x2, t2, m2))
    ref2 = jnp.mean(jnp.abs(x2 - t2) * m2)
    assert jnp.allclose(out2, ref2, rtol=1e-5, atol=1e-6), (out2, ref2)

    # Small tile_rows override to exercise the multi-tile ragged-tail path
    # (the path large tensors hit with the default 8192-row tiles).
    x3 = jax.random.normal(k1, (600, 128), dtype=jnp.float32)
    t3 = jax.random.normal(k2, (600, 128), dtype=jnp.float32)
    m3 = (jax.random.uniform(k3, (600, 128)) > 0.5).astype(jnp.float32)
    out3 = jax.block_until_ready(masked_l1_loss(x3, t3, m3, tile_rows=256))
    ref3 = jnp.mean(jnp.abs(x3 - t3) * m3)
    assert jnp.allclose(out3, ref3, rtol=1e-5, atol=1e-6), (out3, ref3)

    print("KERNEL_OK")
</pallas_src>

<mosaic_0001>
module attributes {stable_mosaic.version = 11 : i64} {
  func.func @kernel(%arg0: i32, %arg1: memref<16x128xf32, #tpu.memory_space<vmem>>, %arg2: memref<16x128xf32, #tpu.memory_space<vmem>>, %arg3: memref<16x128xf32, #tpu.memory_space<vmem>>, %arg4: memref<8x128xf32, #tpu.memory_space<vmem>>) attributes {dimension_semantics = [#tpu.dimension_semantics<arbitrary>], iteration_bounds = array<i64: 1>, scalar_prefetch = 0 : i64, scratch_operands = 0 : i64, tpu.core_type = #tpu.core_type<tc>, window_params = [{transform_indices = @transform_0, window_bounds = array<i64: 16, 128>}, {transform_indices = @transform_1, window_bounds = array<i64: 16, 128>}, {transform_indices = @transform_2, window_bounds = array<i64: 16, 128>}, {pipeline_mode = #tpu.pipeline_mode<synchronous>, transform_indices = @transform_3, window_bounds = array<i64: 8, 128>}]} {
    %c0_i32 = arith.constant 0 : i32
    %0 = arith.cmpi eq, %arg0, %c0_i32 : i32
    %1 = arith.extui %0 : i1 to i32
    %c0_i32_0 = arith.constant 0 : i32
    %2 = arith.cmpi ne, %1, %c0_i32_0 : i32
    scf.if %2 {
      %cst_10 = arith.constant 0.000000e+00 : f32
      %14 = vector.broadcast %cst_10 : f32 to vector<8x128xf32>
      %c0_11 = arith.constant 0 : index
      %c0_12 = arith.constant 0 : index
      %15 = vector.load %arg4[%c0_11, %c0_12] : memref<8x128xf32, #tpu.memory_space<vmem>>, vector<8x128xf32>
      tpu.vector_store %arg4[%c0_11, %c0_12], %14 {strides = array<i32>} : memref<8x128xf32, #tpu.memory_space<vmem>>, vector<8x128xf32>,
    } else {
    }
    %c0 = arith.constant 0 : index
    %c0_1 = arith.constant 0 : index
    %3 = vector.load %arg1[%c0, %c0_1] : memref<16x128xf32, #tpu.memory_space<vmem>>, vector<16x128xf32>
    %c0_2 = arith.constant 0 : index
    %c0_3 = arith.constant 0 : index
    %4 = vector.load %arg2[%c0_2, %c0_3] : memref<16x128xf32, #tpu.memory_space<vmem>>, vector<16x128xf32>
    %5 = arith.subf %3, %4 : vector<16x128xf32>
    %6 = math.absf %5 : vector<16x128xf32>
    %c0_4 = arith.constant 0 : index
    %c0_5 = arith.constant 0 : index
    %7 = vector.load %arg3[%c0_4, %c0_5] : memref<16x128xf32, #tpu.memory_space<vmem>>, vector<16x128xf32>
    %8 = arith.mulf %6, %7 : vector<16x128xf32>
    %c0_6 = arith.constant 0 : index
    %c0_7 = arith.constant 0 : index
    %9 = vector.load %arg4[%c0_6, %c0_7] : memref<8x128xf32, #tpu.memory_space<vmem>>, vector<8x128xf32>
    %10 = vector.shape_cast %8 : vector<16x128xf32> to vector<2x8x128xf32>
    %cst = arith.constant dense<0.000000e+00> : vector<8x128xf32>
    %11 = vector.multi_reduction <add>, %10, %cst [0] : vector<2x8x128xf32> to vector<8x128xf32>
    %12 = arith.addf %9, %11 : vector<8x128xf32>
    %c0_8 = arith.constant 0 : index
    %c0_9 = arith.constant 0 : index
    %13 = vector.load %arg4[%c0_8, %c0_9] : memref<8x128xf32, #tpu.memory_space<vmem>>, vector<8x128xf32>
    tpu.vector_store %arg4[%c0_8, %c0_9], %12 {strides = array<i32>} : memref<8x128xf32, #tpu.memory_space<vmem>>, vector<8x128xf32>,
    return
  }
  func.func @transform_0(%arg0: i32) -> (i32, i32) {
    %c0_i32 = arith.constant 0 : i32
    %c0_i32_0 = arith.constant 0 : i32
    return %arg0, %c0_i32 : i32, i32
  }
  func.func @transform_1(%arg0: i32) -> (i32, i32) {
    %c0_i32 = arith.constant 0 : i32
    %c0_i32_0 = arith.constant 0 : i32
    return %arg0, %c0_i32 : i32, i32
  }
  func.func @transform_2(%arg0: i32) -> (i32, i32) {
    %c0_i32 = arith.constant 0 : i32
    %c0_i32_0 = arith.constant 0 : i32
    return %arg0, %c0_i32 : i32, i32
  }
  func.func @transform_3(%arg0: i32) -> (i32, i32) {
    %c0_i32 = arith.constant 0 : i32
    %c0_i32_0 = arith.constant 0 : i32
    %c0_i32_1 = arith.constant 0 : i32
    return %c0_i32, %c0_i32_0 : i32, i32
  }
}

</mosaic_0001>

<llo_original>
// kernel: tpu_custom_call.1
$region0: #{tpu_custom_call.1}
  #allocation0 [shape = 'u32[]', space=smem, size = 0x4, offset = 0x4, fixed_abs, tag = 'smem constant byte address 0x4 - core index']
  #allocation1 [shape = 'u32[144,128]{1,0:T(1,128)}', space=vmem, size = 0x12000, scoped, tag = 'internal scratch']
  %s0 = inlined_call_operand.hbm [shape: f32[16,128], index: 0, kind: input, shape index: {}]
  %s1 = inlined_call_operand.hbm [shape: f32[16,128], index: 1, kind: input, shape index: {}]
  %s2 = inlined_call_operand.hbm [shape: f32[16,128], index: 2, kind: input, shape index: {}]
  %s3 = inlined_call_operand.hbm [shape: f32[8,128], index: 3, kind: output, shape index: {}]
  %s4 = sld [smem:[#allocation0]]
  $region38: #{tpu_custom_call.1} parent=0
    _
  %s6 = ssub.s32 1, %s4
  %s7 = scalar_select 0, %s6, %s4
  $region1: #{tpu_custom_call.1} parent=0
    #allocation2 [shape = 'u8[8192]{0}', space=vmem, size = 0x2000, scoped, tag = 'input window, operand 0, single buffered']
    #allocation3 [shape = 's32[1]{0}', space=sflag, size = 0x4, scoped, tag = 'scoped memory for tpu_custom_call.1']
    #allocation4 [shape = 's32[1]{0}', space=sflag, size = 0x4, scoped, tag = 'scoped memory for tpu_custom_call.1']
    #allocation5 [shape = 'u8[8192]{0}', space=vmem, size = 0x2000, scoped, tag = 'input window, operand 1, single buffered']
    #allocation6 [shape = 's32[1]{0}', space=sflag, size = 0x4, scoped, tag = 'scoped memory for tpu_custom_call.1']
    #allocation7 [shape = 'u8[8192]{0}', space=vmem, size = 0x2000, scoped, tag = 'input window, operand 2, single buffered']
    #allocation8 [shape = 'u8[4096]{0}', space=vmem, size = 0x1000, scoped, tag = 'output window, operand 0, single buffered']
    %8 = vsyncpa [#allocation3], 0
    %9 = vsyncpa [#allocation6], 0
    %10 = vsyncpa [#allocation4], 0
    // Predicated region
    $region2: #{tpu_custom_call.1} parent=1 // pred_check
      _
    $region3: #{tpu_custom_call.1} parent=1 // pred_check_branch
      %12 = sbr.rel (0) target = $region5
    $region4: #{tpu_custom_call.1} parent=1 // pred_region
      %s14 = ssub.s32 256, 256
      %15 = vsyncadd [#allocation3], %s14
      %s16 = sshll.u32 [#allocation2], 4
      %s17 = int_to_ptr.vmem [resolvable:$true] %s16
      %22 = dma.hbm_to_vmem [thread:$0]  %s0, 256, %s17, [#allocation3], 128, 128, 8
    $region5: #{tpu_custom_call.1} parent=1 // pred_fallthru
      _
    // Predicated region
    $region6: #{tpu_custom_call.1} parent=1 // pred_check
      _
    $region7: #{tpu_custom_call.1} parent=1 // pred_check_branch
      %24 = sbr.rel (0) target = $region9
    $region8: #{tpu_custom_call.1} parent=1 // pred_region
      %s26 = ssub.s32 256, 256
      %27 = vsyncadd [#allocation6], %s26
      %s28 = sshll.u32 [#allocation5], 4
      %s29 = int_to_ptr.vmem [resolvable:$true] %s28
      %34 = dma.hbm_to_vmem [thread:$0]  %s1, 256, %s29, [#allocation6], 128, 128, 8
    $region9: #{tpu_custom_call.1} parent=1 // pred_fallthru
      _
    // Predicated region
    $region10: #{tpu_custom_call.1} parent=1 // pred_check
      _
    $region11: #{tpu_custom_call.1} parent=1 // pred_check_branch
      %36 = sbr.rel (0) target = $region13
    $region12: #{tpu_custom_call.1} parent=1 // pred_region
      %s38 = ssub.s32 256, 256
      %39 = vsyncadd [#allocation6], %s38
      %s40 = sshll.u32 [#allocation7], 4
      %s41 = int_to_ptr.vmem [resolvable:$true] %s40
      %46 = dma.hbm_to_vmem [thread:$0]  %s2, 256, %s41, [#allocation6], 128, 128, 8
    $region13: #{tpu_custom_call.1} parent=1 // pred_fallthru
      _
    // Predicated region
    $region14: #{tpu_custom_call.1} parent=1 // pred_check
      _
    $region15: #{tpu_custom_call.1} parent=1 // pred_check_branch
      %48 = sbr.rel (0) target = $region17
    $region16: #{tpu_custom_call.1} parent=1 // pred_region
      %49 = dma.done [#allocation3], 256
    $region17: #{tpu_custom_call.1} parent=1 // pred_fallthru
      _
    // Predicated region
    $region18: #{tpu_custom_call.1} parent=1 // pred_check
      _
    $region19: #{tpu_custom_call.1} parent=1 // pred_check_branch
      %51 = sbr.rel (0) target = $region21
    $region20: #{tpu_custom_call.1} parent=1 // pred_region
      %52 = dma.done [#allocation6], 256
    $region21: #{tpu_custom_call.1} parent=1 // pred_fallthru
      _
    // Predicated region
    $region22: #{tpu_custom_call.1} parent=1 // pred_check
      _
    $region23: #{tpu_custom_call.1} parent=1 // pred_check_branch
      %54 = sbr.rel (0) target = $region25
    $region24: #{tpu_custom_call.1} parent=1 // pred_region
      %55 = dma.done [#allocation6], 256
    $region25: #{tpu_custom_call.1} parent=1 // pred_fallthru
      _
    %p56 = scmp.eq.s32.totalorder 0, 0
    // Predicated region
    $region26: #{tpu_custom_call.1} parent=1 // pred_check
      %p57 = pneg %p56
    $region27: #{tpu_custom_call.1} parent=1 // pred_check_branch
      %59 = sbr.rel (%p57) target = $region29
    $region28: #{tpu_custom_call.1} parent=1 // pred_region
      %60 = vst [vmem:[#allocation8] sm:$0xff] 0.0
    $region29: #{tpu_custom_call.1} parent=1 // pred_fallthru
      _
    %v61 = vld [vmem:[#allocation2] sm:$0xff]
    %v62 = vld [vmem:[#allocation2 + $0x8] sm:$0xff]
    %v63 = vld [vmem:[#allocation5] sm:$0xff]
    %v64 = vld [vmem:[#allocation5 + $0x8] sm:$0xff]
    %v65 = vsub.f32 %v61, %v63
    %v66 = vsub.f32 %v62, %v64
    %v67 = vand.u32 2147483647, %v65
    %v68 = vand.u32 2147483647, %v66
    %v69 = vld [vmem:[#allocation7] sm:$0xff]
    %v70 = vld [vmem:[#allocation7 + $0x8] sm:$0xff]
    %v71 = vmul.f32 %v67, %v69
    %v72 = vmul.f32 %v68, %v70
    %v73 = vld [vmem:[#allocation8] sm:$0xff]
    %v74 = vadd.f32 %v71, %v72
    %v75 = vadd.f32 %v73, %v74
    %76 = vst [vmem:[#allocation8] sm:$0xff] %v75
    // Predicated region
    $region30: #{tpu_custom_call.1} parent=1 // pred_check
      _
    $region31: #{tpu_custom_call.1} parent=1 // pred_check_branch
      %78 = sbr.rel (0) target = $region33
    $region32: #{tpu_custom_call.1} parent=1 // pred_region
      %s80 = ssub.s32 128, 128
      %81 = vsyncadd [#allocation4], %s80
      %s83 = sshll.u32 [#allocation8], 4
      %s84 = int_to_ptr.vmem [resolvable:$true] %s83
      %86 = dma.vmem_to_hbm [thread:$0]  %s84, 128, %s3, [#allocation4]
    $region33: #{tpu_custom_call.1} parent=1 // pred_fallthru
      _
    // Predicated region
    $region34: #{tpu_custom_call.1} parent=1 // pred_check
      _
    $region35: #{tpu_custom_call.1} parent=1 // pred_check_branch
      %88 = sbr.rel (0) target = $region37
    $region36: #{tpu_custom_call.1} parent=1 // pred_region
      %89 = dma.done [#allocation4], 128
    $region37: #{tpu_custom_call.1} parent=1 // pred_fallthru
      _
    %90 = vsyncpa [#allocation3], 1
    %91 = vsyncpa [#allocation6], 1
    %92 = vsyncpa [#allocation4], 1

</llo_original>
